<compile_context>
chip_gen: v7x
topology: tpu7x:2x2x1
jax: 0.10.0
libtpu: 0.0.40
codegen_flags: <defaults>
</compile_context>

<pallas_src>
import functools

import jax
import jax.numpy as jnp
from jax.experimental import pallas as pl
from jax.experimental.pallas import tpu as pltpu


_TL_CAP = 32768                           # max lane-tile width (mult. of 128)
_BLOCK_BYTES_TARGET = 2 * 1024 * 1024     # target HBM bytes per input block


def _filter_conv_kernel(w_ref, xl_ref, x_ref, xr_ref, o_ref, *,
                        K, pad_l, pad_r, TL, nl):
    """One (TN, TL) output tile of the reflection-padded FIR.

    w_ref : (K,)       f32 SMEM  -- conv taps (scalar broadcasts)
    xl_ref: (TN, 128)  VMEM      -- 128 input columns just left of the tile
                                    (clamped to column block 0 on tile 0)
    x_ref : (TN, TL)   VMEM      -- current input tile (native dtype)
    xr_ref: (TN, 128)  VMEM      -- 128 input columns just right of the tile
                                    (clamped to the last block on the last tile)
    o_ref : (TN, TL)   VMEM      -- output tile (native dtype)
    """
    j = pl.program_id(1)
    x = x_ref[...].astype(jnp.float32)

    # Left halo block: keep it 128 lanes wide so the big `x` block lands at a
    # 128-aligned lane offset in the window (no bulk lane-shift copy).  Only
    # the last pad_l columns are actually consumed by the tap slices.
    left = xl_ref[...].astype(jnp.float32)
    if pad_l > 0:
        # Left reflection (first tile only): x_pad[-pad_l + s] = x[pad_l - s].
        refl_l = jnp.concatenate(
            [x[:, pad_l - s: pad_l - s + 1] for s in range(pad_l)], axis=1)
        tail = jnp.where(j > 0, left[:, 128 - pad_l:], refl_l)
        left = jnp.concatenate([left[:, :128 - pad_l], tail], axis=1)

    pieces = [left, x]
    if pad_r > 0:
        # Right reflection (last tile only): x_pad[L + t] = x[L - 2 - t].
        refl_r = jnp.concatenate(
            [x[:, TL - 2 - t: TL - 1 - t] for t in range(pad_r)], axis=1)
        xr = xr_ref[...].astype(jnp.float32)
        head = jnp.where(j < nl - 1, xr[:, :pad_r], refl_r)
        pieces.append(head)

    # Aligned window: pieces sit at lane offsets 0, 128, 128 + TL.
    window = jnp.concatenate(pieces, axis=1)          # (TN, 128 + TL + pad_r)

    # K fused VPU multiply-adds on lane-shifted slices of the window.
    base = 128 - pad_l
    acc = w_ref[0] * window[:, base: base + TL]
    for k in range(1, K):
        acc = acc + w_ref[k] * window[:, base + k: base + k + TL]
    o_ref[...] = acc.astype(o_ref.dtype)


def _choose_tiles(N, L_pad, itemsize, tl_cap):
    """Lane tile = largest multiple-of-128 divisor of L_pad (<= tl_cap);
    sublane tile grown toward ~_BLOCK_BYTES_TARGET bytes per input block."""
    m = L_pad // 128
    cap = max(tl_cap // 128, 1)
    d = 1
    for cand in range(min(m, cap), 0, -1):
        if m % cand == 0:
            d = cand
            break
    TL = 128 * d

    g = {4: 8, 2: 16, 1: 32}.get(itemsize, 8)         # sublane granularity
    if N <= g:
        TN = N                                        # full-dim block (allowed)
    else:
        tn = max(g, (_BLOCK_BYTES_TARGET // (TL * itemsize)) // g * g)
        TN = int(min(tn, 512, max(g, (N // g) * g)))
    return TN, TL


def make_filter_params(kernel_size=7, identity=True):
    """Conv1d(1, 1, kernel_size, bias=False) weight, shape (1, 1, K)."""
    if identity:
        # torch.nn.init.dirac_: delta at the spatial center (K // 2).
        w = jnp.zeros((1, 1, kernel_size), jnp.float32)
        w = w.at[0, 0, kernel_size // 2].set(1.0)
    else:
        w = jax.random.normal(jax.random.PRNGKey(1), (1, 1, kernel_size),
                              jnp.float32)
    return w


def filter_forward(x, weight, *, tl_cap=_TL_CAP):
    """Forward pass of Filter: reflection pad + 1-D conv (no bias).

    x:      (N, 1, L) float (any float dtype; streamed natively, f32 accum)
    weight: (1, 1, K) float
    returns (N, 1, L), dtype of x
    """
    N, C, L = x.shape
    assert C == 1, "Filter uses a single channel"
    K = weight.shape[-1]
    if K % 2:
        pad_l = pad_r = K // 2
    else:
        pad_l, pad_r = K // 2, K // 2 - 1
    assert L > max(pad_l, pad_r, 1), "reflection pad requires L > K // 2"
    assert max(pad_l, pad_r) < 128, "halo slivers are 128 lanes wide"

    x2 = x[:, 0, :]                                   # (N, L), native dtype
    w = weight.reshape(K).astype(jnp.float32)         # taps -> SMEM scalars

    # Lane-align L.  The pad tail starting at column L carries the *true*
    # right reflection, so every kept output column (< L) sees correct data;
    # the kernel's own right-edge reflection then only touches dropped cols.
    if L % 128 == 0:
        L_pad, x_in = L, x2
    else:
        L_pad = ((L + pad_r + 127) // 128) * 128
        pieces = [x2]
        if pad_r > 0:
            pieces.append(x2[:, L - 1 - pad_r: L - 1][:, ::-1])
        extra = L_pad - L - pad_r
        if extra > 0:
            pieces.append(jnp.zeros((N, extra), x2.dtype))
        x_in = jnp.concatenate(pieces, axis=1)

    TN, TL = _choose_tiles(N, L_pad, jnp.dtype(x.dtype).itemsize, tl_cap)
    nl = L_pad // TL                                  # number of L tiles
    spl = TL // 128                                   # 128-col blocks per tile
    last_blk = L_pad // 128 - 1
    grid = (pl.cdiv(N, TN), nl)

    kernel = functools.partial(
        _filter_conv_kernel, K=K, pad_l=pad_l, pad_r=pad_r, TL=TL, nl=nl)

    out = pl.pallas_call(
        kernel,
        out_shape=jax.ShapeDtypeStruct((N, L_pad), x.dtype),
        grid_spec=pltpu.PrefetchScalarGridSpec(
            num_scalar_prefetch=0,
            grid=grid,
            in_specs=[
                pl.BlockSpec(memory_space=pltpu.MemorySpace.SMEM),    # taps
                pl.BlockSpec((TN, 128),                               # left halo
                             lambda i, j: (i, jnp.maximum(j * spl - 1, 0))),
                pl.BlockSpec((TN, TL), lambda i, j: (i, j)),          # main tile
                pl.BlockSpec((TN, 128),                               # right halo
                             lambda i, j: (i, jnp.minimum((j + 1) * spl,
                                                          last_blk))),
            ],
            out_specs=pl.BlockSpec((TN, TL), lambda i, j: (i, j)),
        ),
        compiler_params=pltpu.CompilerParams(
            dimension_semantics=("parallel", "parallel"),
            vmem_limit_bytes=48 * 1024 * 1024),
    )(w, x_in, x_in, x_in)

    return out[:, None, :L]


def _reference_forward(x, weight):
    """Pure-JAX reference (same semantics) for correctness check."""
    N, _, L = x.shape
    K = weight.shape[-1]
    if K % 2:
        pad_l = pad_r = K // 2
    else:
        pad_l, pad_r = K // 2, K // 2 - 1
    x_pad = jnp.pad(x[:, 0, :].astype(jnp.float32),
                    ((0, 0), (pad_l, pad_r)), mode="reflect")
    w = weight.reshape(K).astype(jnp.float32)
    out = jnp.zeros((N, L), jnp.float32)
    for k in range(K):
        out = out + w[k] * x_pad[:, k:k + L]
    return out[:, None, :].astype(x.dtype)


if __name__ == "__main__":
    key = jax.random.PRNGKey(0)
    kernel_size = 7

    # Test 1: module defaults -- dirac (identity) filter, small NCL input,
    # L not a multiple of 128 (exercises the lane-alignment pad path).
    N, C, L = 2, 1, 16
    x = jax.random.normal(key, (N, C, L), jnp.float32)
    w_id = make_filter_params(kernel_size=kernel_size, identity=True)
    y = jax.block_until_ready(filter_forward(x, w_id))
    y_ref = _reference_forward(x, w_id)
    assert y.shape == (N, C, L)
    assert jnp.allclose(y, y_ref, atol=1e-5, rtol=1e-5)
    # identity=True (dirac init) => the filter is an identity map.
    assert jnp.allclose(y, x, atol=1e-5, rtol=1e-5)

    # Test 2: random taps, multi-tile L (small forced tile cap) -- exercises
    # the interior halo slivers and both edge reflections.
    k2, k3 = jax.random.split(key)
    x2 = jax.random.normal(k2, (8, 1, 1024), jnp.float32)
    w_rnd = jax.random.normal(k3, (1, 1, kernel_size), jnp.float32) * 0.3
    y2 = jax.block_until_ready(filter_forward(x2, w_rnd, tl_cap=256))
    assert jnp.allclose(y2, _reference_forward(x2, w_rnd), atol=1e-4, rtol=1e-4)

    # Test 3: bf16 input streams in its native dtype (f32 accumulation).
    x3 = jax.random.normal(k3, (16, 1, 256), jnp.float32).astype(jnp.bfloat16)
    y3 = jax.block_until_ready(filter_forward(x3, w_rnd))
    assert y3.dtype == jnp.bfloat16
    assert jnp.allclose(y3.astype(jnp.float32),
                        _reference_forward(x3, w_rnd).astype(jnp.float32),
                        atol=2e-2, rtol=2e-2)

    # Test 4: ragged batch (N % TN != 0) -> partial last sublane block.
    x4 = jax.random.normal(k2, (13, 1, 256), jnp.float32)
    y4 = jax.block_until_ready(filter_forward(x4, w_rnd))
    assert jnp.allclose(y4, _reference_forward(x4, w_rnd), atol=1e-4, rtol=1e-4)

    print("KERNEL_OK")
</pallas_src>

<mosaic_0001>
module attributes {stable_mosaic.version = 11 : i64} {
  func.func @_filter_conv_kernel(%arg0: i32, %arg1: i32, %arg2: memref<7xf32, #tpu.memory_space<smem>>, %arg3: memref<2x128xf32, #tpu.memory_space<vmem>>, %arg4: memref<2x128xf32, #tpu.memory_space<vmem>>, %arg5: memref<2x128xf32, #tpu.memory_space<vmem>>, %arg6: memref<2x128xf32, #tpu.memory_space<vmem>>) attributes {dimension_semantics = [#tpu.dimension_semantics<parallel>, #tpu.dimension_semantics<parallel>], iteration_bounds = array<i64: 1, 1>, scalar_prefetch = 0 : i64, scratch_operands = 0 : i64, tpu.core_type = #tpu.core_type<tc>, window_params = [{transform_indices = @transform_0, window_bounds = array<i64: 7>}, {transform_indices = @transform_1, window_bounds = array<i64: 2, 128>}, {transform_indices = @transform_2, window_bounds = array<i64: 2, 128>}, {transform_indices = @transform_3, window_bounds = array<i64: 2, 128>}, {transform_indices = @transform_4, window_bounds = array<i64: 2, 128>}]} {
    %c0 = arith.constant 0 : index
    %c0_0 = arith.constant 0 : index
    %0 = vector.load %arg4[%c0, %c0_0] : memref<2x128xf32, #tpu.memory_space<vmem>>, vector<2x128xf32>
    %c0_1 = arith.constant 0 : index
    %c0_2 = arith.constant 0 : index
    %1 = vector.load %arg3[%c0_1, %c0_2] : memref<2x128xf32, #tpu.memory_space<vmem>>, vector<2x128xf32>
    %2 = vector.extract_strided_slice %0 {offsets = [0, 3], sizes = [2, 1], strides = [1, 1]} : vector<2x128xf32> to vector<2x1xf32>
    %3 = vector.extract_strided_slice %0 {offsets = [0, 2], sizes = [2, 1], strides = [1, 1]} : vector<2x128xf32> to vector<2x1xf32>
    %4 = vector.extract_strided_slice %0 {offsets = [0, 1], sizes = [2, 1], strides = [1, 1]} : vector<2x128xf32> to vector<2x1xf32>
    %5 = tpu.concatenate %2, %3, %4 in 1 : vector<2x1xf32>, vector<2x1xf32>, vector<2x1xf32> -> vector<2x3xf32>
    %c0_i32 = arith.constant 0 : i32
    %6 = arith.cmpi sgt, %arg1, %c0_i32 : i32
    %7 = vector.extract_strided_slice %1 {offsets = [0, 125], sizes = [2, 3], strides = [1, 1]} : vector<2x128xf32> to vector<2x3xf32>
    %8 = arith.select %6, %7, %5 : vector<2x3xf32>
    %9 = vector.extract_strided_slice %1 {offsets = [0, 0], sizes = [2, 125], strides = [1, 1]} : vector<2x128xf32> to vector<2x125xf32>
    %10 = tpu.concatenate %9, %8 in 1 : vector<2x125xf32>, vector<2x3xf32> -> vector<2x128xf32>
    %11 = vector.extract_strided_slice %0 {offsets = [0, 126], sizes = [2, 1], strides = [1, 1]} : vector<2x128xf32> to vector<2x1xf32>
    %12 = vector.extract_strided_slice %0 {offsets = [0, 125], sizes = [2, 1], strides = [1, 1]} : vector<2x128xf32> to vector<2x1xf32>
    %13 = vector.extract_strided_slice %0 {offsets = [0, 124], sizes = [2, 1], strides = [1, 1]} : vector<2x128xf32> to vector<2x1xf32>
    %14 = tpu.concatenate %11, %12, %13 in 1 : vector<2x1xf32>, vector<2x1xf32>, vector<2x1xf32> -> vector<2x3xf32>
    %c0_3 = arith.constant 0 : index
    %c0_4 = arith.constant 0 : index
    %15 = vector.load %arg5[%c0_3, %c0_4] : memref<2x128xf32, #tpu.memory_space<vmem>>, vector<2x128xf32>
    %c0_i32_5 = arith.constant 0 : i32
    %16 = arith.cmpi slt, %arg1, %c0_i32_5 : i32
    %17 = vector.extract_strided_slice %15 {offsets = [0, 0], sizes = [2, 3], strides = [1, 1]} : vector<2x128xf32> to vector<2x3xf32>
    %18 = arith.select %16, %17, %14 : vector<2x3xf32>
    %19 = tpu.concatenate %10, %0, %18 in 1 : vector<2x128xf32>, vector<2x128xf32>, vector<2x3xf32> -> vector<2x259xf32>
    %c0_6 = arith.constant 0 : index
    %20 = memref.load %arg2[%c0_6] : memref<7xf32, #tpu.memory_space<smem>>
    %21 = vector.extract_strided_slice %19 {offsets = [0, 125], sizes = [2, 128], strides = [1, 1]} : vector<2x259xf32> to vector<2x128xf32>
    %22 = vector.broadcast %20 : f32 to vector<2x128xf32>
    %23 = arith.mulf %22, %21 : vector<2x128xf32>
    %c1 = arith.constant 1 : index
    %24 = memref.load %arg2[%c1] : memref<7xf32, #tpu.memory_space<smem>>
    %25 = vector.extract_strided_slice %19 {offsets = [0, 126], sizes = [2, 128], strides = [1, 1]} : vector<2x259xf32> to vector<2x128xf32>
    %26 = vector.broadcast %24 : f32 to vector<2x128xf32>
    %27 = arith.mulf %26, %25 : vector<2x128xf32>
    %28 = arith.addf %23, %27 : vector<2x128xf32>
    %c2 = arith.constant 2 : index
    %29 = memref.load %arg2[%c2] : memref<7xf32, #tpu.memory_space<smem>>
    %30 = vector.extract_strided_slice %19 {offsets = [0, 127], sizes = [2, 128], strides = [1, 1]} : vector<2x259xf32> to vector<2x128xf32>
    %31 = vector.broadcast %29 : f32 to vector<2x128xf32>
    %32 = arith.mulf %31, %30 : vector<2x128xf32>
    %33 = arith.addf %28, %32 : vector<2x128xf32>
    %c3 = arith.constant 3 : index
    %34 = memref.load %arg2[%c3] : memref<7xf32, #tpu.memory_space<smem>>
    %35 = vector.extract_strided_slice %19 {offsets = [0, 128], sizes = [2, 128], strides = [1, 1]} : vector<2x259xf32> to vector<2x128xf32>
    %36 = vector.broadcast %34 : f32 to vector<2x128xf32>
    %37 = arith.mulf %36, %35 : vector<2x128xf32>
    %38 = arith.addf %33, %37 : vector<2x128xf32>
    %c4 = arith.constant 4 : index
    %39 = memref.load %arg2[%c4] : memref<7xf32, #tpu.memory_space<smem>>
    %40 = vector.extract_strided_slice %19 {offsets = [0, 129], sizes = [2, 128], strides = [1, 1]} : vector<2x259xf32> to vector<2x128xf32>
    %41 = vector.broadcast %39 : f32 to vector<2x128xf32>
    %42 = arith.mulf %41, %40 : vector<2x128xf32>
    %43 = arith.addf %38, %42 : vector<2x128xf32>
    %c5 = arith.constant 5 : index
    %44 = memref.load %arg2[%c5] : memref<7xf32, #tpu.memory_space<smem>>
    %45 = vector.extract_strided_slice %19 {offsets = [0, 130], sizes = [2, 128], strides = [1, 1]} : vector<2x259xf32> to vector<2x128xf32>
    %46 = vector.broadcast %44 : f32 to vector<2x128xf32>
    %47 = arith.mulf %46, %45 : vector<2x128xf32>
    %48 = arith.addf %43, %47 : vector<2x128xf32>
    %c6 = arith.constant 6 : index
    %49 = memref.load %arg2[%c6] : memref<7xf32, #tpu.memory_space<smem>>
    %50 = vector.extract_strided_slice %19 {offsets = [0, 131], sizes = [2, 128], strides = [1, 1]} : vector<2x259xf32> to vector<2x128xf32>
    %51 = vector.broadcast %49 : f32 to vector<2x128xf32>
    %52 = arith.mulf %51, %50 : vector<2x128xf32>
    %53 = arith.addf %48, %52 : vector<2x128xf32>
    %c0_7 = arith.constant 0 : index
    %c0_8 = arith.constant 0 : index
    %54 = vector.load %arg6[%c0_7, %c0_8] : memref<2x128xf32, #tpu.memory_space<vmem>>, vector<2x128xf32>
    tpu.vector_store %arg6[%c0_7, %c0_8], %53 {strides = array<i32>} : memref<2x128xf32, #tpu.memory_space<vmem>>, vector<2x128xf32>,
    return
  }
  func.func @transform_0(%arg0: i32, %arg1: i32) -> i32 {
    %c0_i32 = arith.constant 0 : i32
    %c0_i32_0 = arith.constant 0 : i32
    return %c0_i32 : i32
  }
  func.func @transform_1(%arg0: i32, %arg1: i32) -> (i32, i32) {
    %c1_i32 = arith.constant 1 : i32
    %0 = arith.muli %arg1, %c1_i32 : i32
    %c1_i32_0 = arith.constant 1 : i32
    %1 = arith.subi %0, %c1_i32_0 : i32
    %c0_i32 = arith.constant 0 : i32
    %2 = arith.maxsi %1, %c0_i32 : i32
    %c0_i32_1 = arith.constant 0 : i32
    return %arg0, %2 : i32, i32
  }
  func.func @transform_2(%arg0: i32, %arg1: i32) -> (i32, i32) {
    %c0_i32 = arith.constant 0 : i32
    return %arg0, %arg1 : i32, i32
  }
  func.func @transform_3(%arg0: i32, %arg1: i32) -> (i32, i32) {
    %c1_i32 = arith.constant 1 : i32
    %0 = arith.addi %arg1, %c1_i32 : i32
    %c1_i32_0 = arith.constant 1 : i32
    %1 = arith.muli %0, %c1_i32_0 : i32
    %c0_i32 = arith.constant 0 : i32
    %2 = arith.minsi %1, %c0_i32 : i32
    %c0_i32_1 = arith.constant 0 : i32
    return %arg0, %2 : i32, i32
  }
  func.func @transform_4(%arg0: i32, %arg1: i32) -> (i32, i32) {
    %c0_i32 = arith.constant 0 : i32
    return %arg0, %arg1 : i32, i32
  }
}

</mosaic_0001>

<llo_original>
// kernel: tpu_custom_call.1
$region0: #{tpu_custom_call.1}
  #allocation0 [shape = 'u32[]', space=smem, size = 0x4, offset = 0x4, fixed_abs, tag = 'smem constant byte address 0x4 - core index']
  #allocation1 [shape = 'u32[144,128]{1,0:T(1,128)}', space=vmem, size = 0x12000, scoped, tag = 'internal scratch']
  %s0 = inlined_call_operand.hbm [shape: f32[7], index: 0, kind: input, shape index: {}]
  %s1 = inlined_call_operand.vmem [shape: f32[2,128], index: 1, kind: input, shape index: {}]
  %s2 = inlined_call_operand.vmem [shape: f32[2,128], index: 2, kind: input, shape index: {}]
  %s3 = inlined_call_operand.vmem [shape: f32[2,128], index: 3, kind: input, shape index: {}]
  %s4 = inlined_call_operand.hbm [shape: f32[2,128], index: 4, kind: output, shape index: {}]
  %s5 = sld [smem:[#allocation0]]
  $region30: #{tpu_custom_call.1} parent=0
    _
  %s7 = ssub.s32 1, %s5
  %s8 = scalar_select 0, %s7, %s5
  $region1: #{tpu_custom_call.1} parent=0
    #allocation2 [shape = 'u8[512]{0}', space=smem, size = 0x200, scoped, tag = 'input window, operand 0, single buffered']
    #allocation3 [shape = 's32[1]{0}', space=sflag, size = 0x4, scoped, tag = 'scoped memory for tpu_custom_call.1']
    #allocation4 [shape = 's32[1]{0}', space=sflag, size = 0x4, scoped, tag = 'scoped memory for tpu_custom_call.1']
    #allocation5 [shape = 'u8[1024]{0}', space=vmem, size = 0x400, scoped, tag = 'output window, operand 0, single buffered']
    %9 = vsyncpa [#allocation4], 0
    %10 = vsyncpa [#allocation3], 0
    // Predicated region
    $region2: #{tpu_custom_call.1} parent=1 // pred_check
      _
    $region3: #{tpu_custom_call.1} parent=1 // pred_check_branch
      %12 = sbr.rel (0) target = $region5
    $region4: #{tpu_custom_call.1} parent=1 // pred_region
      %s14 = ssub.s32 16, 16
      %15 = vsyncadd [#allocation4], %s14
      %18 = dma.hbm_to_smem %s0, 16, [#allocation2], [#allocation4]
    $region5: #{tpu_custom_call.1} parent=1 // pred_fallthru
      _
    // Predicated region
    $region6: #{tpu_custom_call.1} parent=1 // pred_check
      _
    $region7: #{tpu_custom_call.1} parent=1 // pred_check_branch
      %20 = sbr.rel (0) target = $region9
    $region8: #{tpu_custom_call.1} parent=1 // pred_region
      %s21 = ssub.s32 0, 1
      %p22 = scmp.gt.s32.totalorder %s21, 0
      %s23 = scalar_select %p22, %s21, 0
      %p24 = scmp.lt.s32.totalorder %s23, 0
      %s25 = scalar_select %p24, %s23, 0
      %s26 = smul.addr %s25, 2
      %s27 = scalar_lea.vmem %s1, %s26
      %s28 = ssub.s32 0, 1
      %p29 = scmp.gt.s32.totalorder %s28, 0
      %s30 = scalar_select %p29, %s28, 0
    $region9: #{tpu_custom_call.1} parent=1 // pred_fallthru
      _
    // Predicated region
    $region10: #{tpu_custom_call.1} parent=1 // pred_check
      _
    $region11: #{tpu_custom_call.1} parent=1 // pred_check_branch
      %32 = sbr.rel (0) target = $region13
    $region12: #{tpu_custom_call.1} parent=1 // pred_region
      _
    $region13: #{tpu_custom_call.1} parent=1 // pred_fallthru
      _
    // Predicated region
    $region14: #{tpu_custom_call.1} parent=1 // pred_check
      _
    $region15: #{tpu_custom_call.1} parent=1 // pred_check_branch
      %34 = sbr.rel (0) target = $region17
    $region16: #{tpu_custom_call.1} parent=1 // pred_region
      %s35 = sadd.s32 0, 1
      %p36 = scmp.lt.s32.totalorder %s35, 0
      %s37 = scalar_select %p36, %s35, 0
      %p38 = scmp.lt.s32.totalorder %s37, 0
      %s39 = scalar_select %p38, %s37, 0
      %s40 = smul.addr %s39, 2
      %s41 = scalar_lea.vmem %s3, %s40
      %s42 = sadd.s32 0, 1
      %p43 = scmp.lt.s32.totalorder %s42, 0
      %s44 = scalar_select %p43, %s42, 0
    $region17: #{tpu_custom_call.1} parent=1 // pred_fallthru
      _
    // Predicated region
    $region18: #{tpu_custom_call.1} parent=1 // pred_check
      _
    $region19: #{tpu_custom_call.1} parent=1 // pred_check_branch
      %46 = sbr.rel (0) target = $region21
    $region20: #{tpu_custom_call.1} parent=1 // pred_region
      %47 = dma.done [#allocation4], 16
    $region21: #{tpu_custom_call.1} parent=1 // pred_fallthru
      _
    %48 = sfence
    %s49 = ssub.s32 0, 1
    %p50 = scmp.gt.s32.totalorder %s49, 0
    %s51 = scalar_select %p50, %s49, 0
    %p52 = scmp.lt.s32.totalorder %s51, 0
    %s53 = scalar_select %p52, %s51, 0
    %s54 = smul.addr %s53, 2
    %s55 = scalar_lea.vmem %s1, %s54
    %s56 = sadd.s32 0, 1
    %p57 = scmp.lt.s32.totalorder %s56, 0
    %s58 = scalar_select %p57, %s56, 0
    %p59 = scmp.lt.s32.totalorder %s58, 0
    %s60 = scalar_select %p59, %s58, 0
    %s61 = smul.addr %s60, 2
    %s62 = scalar_lea.vmem %s3, %s61
    %s63 = ssub.s32 0, 1
    %p64 = scmp.gt.s32.totalorder %s63, 0
    %s65 = scalar_select %p64, %s63, 0
    %p66 = scmp.lt.s32.totalorder %s65, 0
    %s67 = scalar_select %p66, %s65, 0
    %s68 = smul.addr %s67, 2
    %s69 = scalar_lea.vmem %s1, %s68
    %s70 = ssub.s32 0, 1
    %p71 = scmp.gt.s32.totalorder %s70, 0
    %s72 = scalar_select %p71, %s70, 0
    %s73 = sadd.s32 0, 1
    %p74 = scmp.lt.s32.totalorder %s73, 0
    %s75 = scalar_select %p74, %s73, 0
    %p76 = scmp.lt.s32.totalorder %s75, 0
    %s77 = scalar_select %p76, %s75, 0
    %s78 = smul.addr %s77, 2
    %s79 = scalar_lea.vmem %s3, %s78
    %s80 = sadd.s32 0, 1
    %p81 = scmp.lt.s32.totalorder %s80, 0
    %s82 = scalar_select %p81, %s80, 0
    %v83 = vld [vmem:[%s2] sm:$0x3]
    %v84 = vld [vmem:[%s69] sm:$0x3]
    %86 = vrot.lane.b32.xlu0 %v83, 125
    %v87 = vpop.permute.xlu0 %86
    %89 = vrot.lane.b32.xlu0 %v83, 127
    %v90 = vpop.permute.xlu0 %89
    %92 = vrot.lane.b32.xlu0 %v83, 1
    %v93 = vpop.permute.xlu0 %92
    %vm95 = vcmask 7168
    %v96 = vsel %vm95, %v87, %v90
    %vm97 = vcmask 15360
    %v98 = vsel %vm97, %v96, %v93
    %p99 = scmp.gt.s32.totalorder 0, 0
    %s100 = scalar_select %p99, 1, 0
    %v101 = vstv %s100
    %vm102 = vcmp.eq.s32.totalorder %v101, 1
    %104 = vrot.lane.b32.xlu0 %v98, 125
    %v105 = vpop.permute.xlu0 %104
    %v107 = vsel %vm102, %v84, %v105
    %vm108 = vcmask 1022976
    %v109 = vsel %vm108, %v84, %v107
    %110 = vrot.lane.b32.xlu0 %v83, 2
    %v111 = vpop.permute.xlu0 %110
    %113 = vrot.lane.b32.xlu0 %v83, 4
    %v114 = vpop.permute.xlu0 %113
    %116 = vrot.lane.b32.xlu0 %v83, 6
    %v117 = vpop.permute.xlu0 %116
    %v119 = vsel %vm95, %v111, %v114
    %v120 = vsel %vm97, %v119, %v117
    %v121 = vld [vmem:[%s79] sm:$0x3]
    %p122 = scmp.lt.s32.totalorder 0, 0
    %s123 = scalar_select %p122, 1, 0
    %v124 = vstv %s123
    %vm125 = vcmp.eq.s32.totalorder %v124, 1
    %v126 = vsel %vm125, %v121, %v120
    %s127 = sld [smem:[#allocation2]]
    %v128 = vstv %s127
    %v129 = vmul.f32 %v128, %v109
    %v130 = vmul.f32 %v128, %v83
    %s131 = sld [smem:[#allocation2 + $0x1]]
    %v132 = vstv %s131
    %v133 = vmul.f32 %v132, %v109
    %v134 = vmul.f32 %v132, %v83
    %137 = vrot.lane.b32.xlu0 %v133, 127
    %v138 = vpop.permute.xlu0 %137
    %139 = vrot.lane.b32.xlu0 %v134, 127
    %v140 = vpop.permute.xlu0 %139
    %vm141 = vcmask 1039360
    %v142 = vsel %vm141, %v138, %v140
    %v145 = vadd.f32 %v129, %v142
    %v146 = vadd.f32 %v130, %v140
    %s147 = sld [smem:[#allocation2 + $0x2]]
    %v148 = vstv %s147
    %v149 = vmul.f32 %v148, %v109
    %v150 = vmul.f32 %v148, %v83
    %153 = vrot.lane.b32.xlu0 %v149, 126
    %v154 = vpop.permute.xlu0 %153
    %155 = vrot.lane.b32.xlu0 %v150, 126
    %v156 = vpop.permute.xlu0 %155
    %vm157 = vcmask 1031168
    %v158 = vsel %vm157, %v154, %v156
    %v161 = vadd.f32 %v145, %v158
    %v162 = vadd.f32 %v146, %v156
    %s163 = sld [smem:[#allocation2 + $0x3]]
    %v164 = vstv %s163
    %v165 = vmul.f32 %v164, %v83
    %167 = vrot.lane.b32.xlu0 %v165, 125
    %v168 = vpop.permute.xlu0 %167
    %v170 = vadd.f32 %v161, %v168
    %v171 = vadd.f32 %v162, %v168
    %s172 = sld [smem:[#allocation2 + $0x4]]
    %v173 = vstv %s172
    %v174 = vmul.f32 %v173, %v83
    %v175 = vmul.f32 %v173, %v126
    %178 = vrot.lane.b32.xlu0 %v174, 124
    %v179 = vpop.permute.xlu0 %178
    %180 = vrot.lane.b32.xlu0 %v175, 124
    %v181 = vpop.permute.xlu0 %180
    %vm182 = vcmask 1014784
    %v183 = vsel %vm182, %v179, %v181
    %v186 = vadd.f32 %v170, %v179
    %v187 = vadd.f32 %v171, %v183
    %s188 = sld [smem:[#allocation2 + $0x5]]
    %v189 = vstv %s188
    %v190 = vmul.f32 %v189, %v83
    %v191 = vmul.f32 %v189, %v126
    %194 = vrot.lane.b32.xlu0 %v190, 123
    %v195 = vpop.permute.xlu0 %194
    %196 = vrot.lane.b32.xlu0 %v191, 123
    %v197 = vpop.permute.xlu0 %196
    %vm198 = vcmask 1006592
    %v199 = vsel %vm198, %v195, %v197
    %v202 = vadd.f32 %v186, %v195
    %v203 = vadd.f32 %v187, %v199
    %s204 = sld [smem:[#allocation2 + $0x6]]
    %v205 = vstv %s204
    %v206 = vmul.f32 %v205, %v83
    %v207 = vmul.f32 %v205, %v126
    %210 = vrot.lane.b32.xlu0 %v206, 122
    %v211 = vpop.permute.xlu0 %210
    %212 = vrot.lane.b32.xlu0 %v207, 122
    %v213 = vpop.permute.xlu0 %212
    %vm214 = vcmask 998400
    %v215 = vsel %vm214, %v211, %v213
    %v218 = vadd.f32 %v202, %v211
    %v219 = vadd.f32 %v203, %v215
    %222 = vrot.lane.b32.xlu0 %v218, 3
    %v223 = vpop.permute.xlu0 %222
    %224 = vrot.lane.b32.xlu0 %v219, 3
    %v225 = vpop.permute.xlu0 %224
    %vm226 = vcmask 23552
    %v227 = vsel %vm226, %v223, %v225
    %229 = vst [vmem:[#allocation5] sm:$0x3] %v227
    // Predicated region
    $region22: #{tpu_custom_call.1} parent=1 // pred_check
      _
    $region23: #{tpu_custom_call.1} parent=1 // pred_check_branch
      %231 = sbr.rel (0) target = $region25
    $region24: #{tpu_custom_call.1} parent=1 // pred_region
      %s233 = ssub.s32 32, 32
      %234 = vsyncadd [#allocation3], %s233
      %s236 = sshll.u32 [#allocation5], 4
      %s237 = int_to_ptr.vmem [resolvable:$true] %s236
      %239 = dma.vmem_to_hbm [thread:$0]  %s237, 32, %s4, [#allocation3]
    $region25: #{tpu_custom_call.1} parent=1 // pred_fallthru
      _
    // Predicated region
    $region26: #{tpu_custom_call.1} parent=1 // pred_check
      _
    $region27: #{tpu_custom_call.1} parent=1 // pred_check_branch
      %241 = sbr.rel (0) target = $region29
    $region28: #{tpu_custom_call.1} parent=1 // pred_region
      %242 = dma.done [#allocation3], 32
    $region29: #{tpu_custom_call.1} parent=1 // pred_fallthru
      _
    %243 = vsyncpa [#allocation3], 1
    %244 = vsyncpa [#allocation4], 1

</llo_original>
